<compile_context>
chip_gen: v5e
topology: v5e:2x2
jax: 0.10.0
libtpu: 0.0.40
codegen_flags: <defaults>
</compile_context>

<pallas_src>
import functools

import jax
import jax.numpy as jnp
from jax.experimental import pallas as pl
from jax.experimental.pallas import tpu as pltpu

_LANES = 128
_SUBLANES = 8


def _round_up(x, m):
    return -(-x // m) * m


def _default_tanh_dtype():
    """bf16 tanh only where the EUP/VPU have bf16 paths (v6e / v7x)."""
    try:
        kind = jax.devices()[0].device_kind.lower()
    except Exception:  # pragma: no cover - conservative fallback
        return jnp.float32
    if "v6" in kind or "v7" in kind:
        return jnp.bfloat16
    return jnp.float32


def _plan_rows(hw, nc, num_banks, in_item=4, out_item=4,
               vmem_budget=24 << 20, min_step_in_bytes=2 << 20):
    """Pick (rows_per_block, padded_rows) of 128-pixel rows.

    rows_per_block is a multiple of 8 (or the full extent for tiny images),
    sized for >= min_step_in_bytes of input per grid step and a double-
    buffered in+out working set <= vmem_budget, with >= 2 grid steps when the
    image is big enough (v7x megacore).
    """
    hw_rows = -(-hw // _LANES)
    if hw_rows <= _SUBLANES:
        return hw_rows, hw_rows                      # one full block (tiny image)
    per_row_in = _LANES * nc * in_item
    per_row_all = _LANES * nc * (in_item + num_banks * out_item)
    br_cap = max(_SUBLANES,
                 (vmem_budget // (2 * per_row_all)) // _SUBLANES * _SUBLANES)
    br_goal = _round_up(max(_SUBLANES, -(-min_step_in_bytes // per_row_in)),
                        _SUBLANES)
    br = min(br_cap, br_goal, _round_up(hw_rows, _SUBLANES))
    half_rows = (hw_rows // 2) // _SUBLANES * _SUBLANES
    if half_rows >= _SUBLANES:                       # keep >= 2 grid steps
        br = min(br, half_rows)
    rows_padded = _round_up(hw_rows, br)
    return br, rows_padded


def _adapt_kernel(half_amp_ref, hs_ref, bias_ref, const_ref, img_ref,
                  out_ref, *minmax_refs,
                  num_banks, num_terms, num_channels, tanh_dtype,
                  track_minmax):
    """Per-tile body.

    img_ref: (N, C, BR, 128) f32 VMEM.  out_ref: (N, J*C, BR, 128).
    half_amp/hs/bias: (J, I) f32 SMEM; const: (J,) f32 SMEM.
    Optional minmax_refs: two (1, J, 128) VMEM outputs with per-lane partial
    min / max of each bank (norm=True path).
    """
    x = img_ref[...]                                        # (N, C, BR, 128) f32
    for j in range(num_banks):                              # J tiny & static -> unrolled
        acc = None
        for i in range(num_terms):                          # I tiny & static -> unrolled
            arg = x * hs_ref[j, i] + bias_ref[j, i]         # f32 affine (VPU)
            t = jnp.tanh(arg.astype(tanh_dtype))            # EUP; bf16 on v6e/v7x
            term = half_amp_ref[j, i] * t.astype(jnp.float32)
            acc = term if acc is None else acc + term
        acc = acc + const_ref[j]                            # fold 0.5 * sum|a|
        out_ref[:, j * num_channels:(j + 1) * num_channels, :, :] = (
            acc.astype(out_ref.dtype))
        if track_minmax:
            mn_ref, mx_ref = minmax_refs
            mn_ref[0, j, :] = jnp.min(acc, axis=(0, 1, 2))  # per-lane partial min
            mx_ref[0, j, :] = jnp.max(acc, axis=(0, 1, 2))


def adapt_transform2(img, hu_lis, norm_lis, smooth_lis, norm=False,
                     tanh_dtype=None, out_dtype=jnp.float32):
    """JAX/Pallas equivalent of Adapt_transform2.forward (img is NCHW)."""
    # TODO(synk): pass out_dtype=jnp.bfloat16 on HBM-bound v5e if downstream
    # consumers tolerate bf16 (output is J x the input size in bytes).
    if tanh_dtype is None:
        tanh_dtype = _default_tanh_dtype()

    img = jnp.asarray(img)
    hu_lis = jnp.asarray(hu_lis, jnp.float32)
    norm_lis = jnp.asarray(norm_lis, jnp.float32)
    smooth_lis = jnp.asarray(smooth_lis, jnp.float32)

    N, C, H, W = img.shape
    J, I = hu_lis.shape
    HW = H * W

    # Tiny per-(j, i) scalar coefficients: sigmoid -> tanh rewrite.
    #   |a|/(1+exp((t-x)/s)) = 0.5|a| + 0.5|a|*tanh(x*hs + b), hs=0.5/s, b=-t*hs
    s = 100.0 * jnp.abs(smooth_lis) + 30.0
    t = 100.0 * jnp.cumsum(hu_lis, axis=1)
    hs = 0.5 / s
    bias = -t * hs
    half_amp = 0.5 * jnp.abs(norm_lis)
    const = jnp.sum(half_amp, axis=1)                       # (J,)

    out_item = jnp.dtype(out_dtype).itemsize
    br, rows_padded = _plan_rows(HW, N * C, J, in_item=4, out_item=out_item)
    hw_padded = rows_padded * _LANES
    num_steps = rows_padded // br

    flat = img.reshape(N, C, HW).astype(jnp.float32)
    if hw_padded != HW:
        # Edge padding replicates real pixels, so padded outputs lie inside the
        # real per-bank [min, max] and the fused min/max stays exact.
        flat = jnp.pad(flat, ((0, 0), (0, 0), (0, hw_padded - HW)), mode="edge")
    img4 = flat.reshape(N, C, rows_padded, _LANES)

    out_shapes = [jax.ShapeDtypeStruct((N, J * C, rows_padded, _LANES), out_dtype)]
    out_specs = [pl.BlockSpec((N, J * C, br, _LANES), lambda r: (0, 0, r, 0))]
    if norm:
        out_shapes += [jax.ShapeDtypeStruct((num_steps, J, _LANES), jnp.float32)] * 2
        out_specs += [pl.BlockSpec((1, J, _LANES), lambda r: (r, 0, 0))] * 2

    in_block_bytes = N * C * br * _LANES * 4
    out_block_bytes = N * J * C * br * _LANES * out_item
    vmem_limit = int(min(48 << 20,
                         max(16 << 20, 2 * (in_block_bytes + out_block_bytes)
                             + (4 << 20))))

    results = pl.pallas_call(
        functools.partial(_adapt_kernel, num_banks=J, num_terms=I,
                          num_channels=C, tanh_dtype=tanh_dtype,
                          track_minmax=bool(norm)),
        out_shape=tuple(out_shapes) if norm else out_shapes[0],
        grid=(num_steps,),
        in_specs=[
            pl.BlockSpec(memory_space=pltpu.MemorySpace.SMEM),   # half_amp (J, I)
            pl.BlockSpec(memory_space=pltpu.MemorySpace.SMEM),   # hs       (J, I)
            pl.BlockSpec(memory_space=pltpu.MemorySpace.SMEM),   # bias     (J, I)
            pl.BlockSpec(memory_space=pltpu.MemorySpace.SMEM),   # const    (J,)
            pl.BlockSpec((N, C, br, _LANES), lambda r: (0, 0, r, 0)),
        ],
        out_specs=tuple(out_specs) if norm else out_specs[0],
        compiler_params=pltpu.CompilerParams(
            dimension_semantics=("parallel",),
            vmem_limit_bytes=vmem_limit),
    )(half_amp, hs, bias, const, img4)

    if norm:
        out4, pmn, pmx = results
    else:
        out4 = results

    # (N, J*C, ROWS, 128) -> (N, J, C, P): free contiguous view.
    out = out4.reshape(N, J, C, hw_padded)
    if hw_padded != HW:
        out = out[:, :, :, :HW]

    if norm:
        # Per-bank global min-max normalization (no epsilon, as in the
        # reference); mx == mn gives inf/nan exactly like PyTorch would.
        mn = pmn.min(axis=(0, 2)).reshape(1, J, 1, 1).astype(out.dtype)
        mx = pmx.max(axis=(0, 2)).reshape(1, J, 1, 1).astype(out.dtype)
        out = (out - mn) / (mx - mn)

    # (N, J, C, HW) -> (N, J*C, H, W): exactly torch.cat over j along dim=1.
    return out.reshape(N, J * C, H, W)


def _reference(img, hu_lis, norm_lis, smooth_lis, norm=False):
    """Pure-JAX transcription of the PyTorch forward, for verification."""
    outs = []
    for j in range(hu_lis.shape[0]):
        cur = jnp.zeros_like(img)
        for i in range(hu_lis.shape[1]):
            cur = cur + jnp.abs(norm_lis[j, i]) / (
                1.0 + jnp.exp((-img + 100.0 * jnp.sum(hu_lis[j, : i + 1]))
                              / (100.0 * jnp.abs(smooth_lis[j, i]) + 30.0)))
        if norm:
            cur = (cur - cur.min()) / (cur.max() - cur.min())
        outs.append(cur)
    return jnp.concatenate(outs, axis=1)


if __name__ == "__main__":
    key = jax.random.PRNGKey(0)
    k_img, k_img2 = jax.random.split(key, 2)

    # Deterministic parameters; shapes (J, I) as implied by forward().
    J, I = 2, 3
    hu_lis = jnp.array([[-8.0, 4.0, 3.0],
                        [-5.0, 2.0, 6.0]], dtype=jnp.float32)
    norm_lis = jnp.array([[0.5, -1.0, 2.0],
                          [1.5, 0.25, -0.75]], dtype=jnp.float32)
    smooth_lis = jnp.array([[0.1, -0.3, 0.5],
                            [0.2, 0.4, -0.6]], dtype=jnp.float32)

    # Case A: small CT-like NCHW input, strict f32 check, both norm modes.
    N, C, H, W = 2, 4, 16, 16
    img = (jax.random.normal(k_img, (N, C, H, W), dtype=jnp.float32) * 400.0
           - 200.0)

    out = jax.block_until_ready(adapt_transform2(
        img, hu_lis, norm_lis, smooth_lis, norm=False, tanh_dtype=jnp.float32))
    ref = _reference(img, hu_lis, norm_lis, smooth_lis, norm=False)
    assert out.shape == (N, J * C, H, W), out.shape
    assert jnp.allclose(out, ref, rtol=1e-4, atol=1e-4), float(
        jnp.max(jnp.abs(out - ref)))

    out_n = jax.block_until_ready(adapt_transform2(
        img, hu_lis, norm_lis, smooth_lis, norm=True, tanh_dtype=jnp.float32))
    ref_n = _reference(img, hu_lis, norm_lis, smooth_lis, norm=True)
    assert jnp.allclose(out_n, ref_n, rtol=1e-4, atol=1e-4), float(
        jnp.max(jnp.abs(out_n - ref_n)))

    # Case B: odd spatial size -> exercises edge padding, multi-step grid and
    # the fused per-tile min/max (norm=True), still strict f32.
    N2, C2, H2, W2 = 1, 1, 72, 72
    img2 = (jax.random.normal(k_img2, (N2, C2, H2, W2), dtype=jnp.float32)
            * 400.0 - 200.0)
    out2 = jax.block_until_ready(adapt_transform2(
        img2, hu_lis, norm_lis, smooth_lis, norm=True, tanh_dtype=jnp.float32))
    ref2 = _reference(img2, hu_lis, norm_lis, smooth_lis, norm=True)
    assert out2.shape == (N2, J * C2, H2, W2), out2.shape
    assert jnp.allclose(out2, ref2, rtol=1e-4, atol=1e-4), float(
        jnp.max(jnp.abs(out2 - ref2)))

    # Case C: default (auto) tanh dtype -- bf16 on v6e/v7x, so use a looser
    # tolerance; on older chips this is the f32 path again.
    out3 = jax.block_until_ready(adapt_transform2(
        img, hu_lis, norm_lis, smooth_lis, norm=False))
    assert out3.shape == (N, J * C, H, W), out3.shape
    assert jnp.allclose(out3, ref, rtol=1e-1, atol=2e-1), float(
        jnp.max(jnp.abs(out3 - ref)))

    print("KERNEL_OK")
</pallas_src>

<mosaic_0001>
module attributes {stable_mosaic.version = 11 : i64} {
  func.func @_adapt_kernel(%arg0: i32, %arg1: memref<2x3xf32, #tpu.memory_space<smem>>, %arg2: memref<2x3xf32, #tpu.memory_space<smem>>, %arg3: memref<2x3xf32, #tpu.memory_space<smem>>, %arg4: memref<2xf32, #tpu.memory_space<smem>>, %arg5: memref<2x4x2x128xf32, #tpu.memory_space<vmem>>, %arg6: memref<2x8x2x128xf32, #tpu.memory_space<vmem>>) attributes {dimension_semantics = [#tpu.dimension_semantics<parallel>], iteration_bounds = array<i64: 1>, scalar_prefetch = 0 : i64, scratch_operands = 0 : i64, tpu.core_type = #tpu.core_type<tc>, window_params = [{transform_indices = @transform_0, window_bounds = array<i64: 2, 3>}, {transform_indices = @transform_1, window_bounds = array<i64: 2, 3>}, {transform_indices = @transform_2, window_bounds = array<i64: 2, 3>}, {transform_indices = @transform_3, window_bounds = array<i64: 2>}, {transform_indices = @transform_4, window_bounds = array<i64: 2, 4, 2, 128>}, {transform_indices = @transform_5, window_bounds = array<i64: 2, 8, 2, 128>}]} {
    %c0 = arith.constant 0 : index
    %c0_0 = arith.constant 0 : index
    %c0_1 = arith.constant 0 : index
    %c0_2 = arith.constant 0 : index
    %0 = vector.load %arg5[%c0, %c0_0, %c0_1, %c0_2] : memref<2x4x2x128xf32, #tpu.memory_space<vmem>>, vector<2x4x2x128xf32>
    %c0_3 = arith.constant 0 : index
    %c0_4 = arith.constant 0 : index
    %1 = memref.load %arg2[%c0_3, %c0_4] : memref<2x3xf32, #tpu.memory_space<smem>>
    %2 = vector.broadcast %1 : f32 to vector<2x4x2x128xf32>
    %3 = arith.mulf %0, %2 : vector<2x4x2x128xf32>
    %c0_5 = arith.constant 0 : index
    %c0_6 = arith.constant 0 : index
    %4 = memref.load %arg3[%c0_5, %c0_6] : memref<2x3xf32, #tpu.memory_space<smem>>
    %5 = vector.broadcast %4 : f32 to vector<2x4x2x128xf32>
    %6 = arith.addf %3, %5 : vector<2x4x2x128xf32>
    %7 = math.tanh %6 : vector<2x4x2x128xf32>
    %c0_7 = arith.constant 0 : index
    %c0_8 = arith.constant 0 : index
    %8 = memref.load %arg1[%c0_7, %c0_8] : memref<2x3xf32, #tpu.memory_space<smem>>
    %9 = vector.broadcast %8 : f32 to vector<2x4x2x128xf32>
    %10 = arith.mulf %9, %7 : vector<2x4x2x128xf32>
    %c0_9 = arith.constant 0 : index
    %c1 = arith.constant 1 : index
    %11 = memref.load %arg2[%c0_9, %c1] : memref<2x3xf32, #tpu.memory_space<smem>>
    %12 = vector.broadcast %11 : f32 to vector<2x4x2x128xf32>
    %13 = arith.mulf %0, %12 : vector<2x4x2x128xf32>
    %c0_10 = arith.constant 0 : index
    %c1_11 = arith.constant 1 : index
    %14 = memref.load %arg3[%c0_10, %c1_11] : memref<2x3xf32, #tpu.memory_space<smem>>
    %15 = vector.broadcast %14 : f32 to vector<2x4x2x128xf32>
    %16 = arith.addf %13, %15 : vector<2x4x2x128xf32>
    %17 = math.tanh %16 : vector<2x4x2x128xf32>
    %c0_12 = arith.constant 0 : index
    %c1_13 = arith.constant 1 : index
    %18 = memref.load %arg1[%c0_12, %c1_13] : memref<2x3xf32, #tpu.memory_space<smem>>
    %19 = vector.broadcast %18 : f32 to vector<2x4x2x128xf32>
    %20 = arith.mulf %19, %17 : vector<2x4x2x128xf32>
    %21 = arith.addf %10, %20 : vector<2x4x2x128xf32>
    %c0_14 = arith.constant 0 : index
    %c2 = arith.constant 2 : index
    %22 = memref.load %arg2[%c0_14, %c2] : memref<2x3xf32, #tpu.memory_space<smem>>
    %23 = vector.broadcast %22 : f32 to vector<2x4x2x128xf32>
    %24 = arith.mulf %0, %23 : vector<2x4x2x128xf32>
    %c0_15 = arith.constant 0 : index
    %c2_16 = arith.constant 2 : index
    %25 = memref.load %arg3[%c0_15, %c2_16] : memref<2x3xf32, #tpu.memory_space<smem>>
    %26 = vector.broadcast %25 : f32 to vector<2x4x2x128xf32>
    %27 = arith.addf %24, %26 : vector<2x4x2x128xf32>
    %28 = math.tanh %27 : vector<2x4x2x128xf32>
    %c0_17 = arith.constant 0 : index
    %c2_18 = arith.constant 2 : index
    %29 = memref.load %arg1[%c0_17, %c2_18] : memref<2x3xf32, #tpu.memory_space<smem>>
    %30 = vector.broadcast %29 : f32 to vector<2x4x2x128xf32>
    %31 = arith.mulf %30, %28 : vector<2x4x2x128xf32>
    %32 = arith.addf %21, %31 : vector<2x4x2x128xf32>
    %c0_19 = arith.constant 0 : index
    %33 = memref.load %arg4[%c0_19] : memref<2xf32, #tpu.memory_space<smem>>
    %34 = vector.broadcast %33 : f32 to vector<2x4x2x128xf32>
    %35 = arith.addf %32, %34 : vector<2x4x2x128xf32>
    %c0_20 = arith.constant 0 : index
    %c0_21 = arith.constant 0 : index
    %c0_22 = arith.constant 0 : index
    %c0_23 = arith.constant 0 : index
    %36 = vector.load %arg6[%c0_20, %c0_21, %c0_22, %c0_23] : memref<2x8x2x128xf32, #tpu.memory_space<vmem>>, vector<2x4x2x128xf32>
    tpu.vector_store %arg6[%c0_20, %c0_21, %c0_22, %c0_23], %35 {strides = array<i32>} : memref<2x8x2x128xf32, #tpu.memory_space<vmem>>, vector<2x4x2x128xf32>,
    %c1_24 = arith.constant 1 : index
    %c0_25 = arith.constant 0 : index
    %37 = memref.load %arg2[%c1_24, %c0_25] : memref<2x3xf32, #tpu.memory_space<smem>>
    %38 = vector.broadcast %37 : f32 to vector<2x4x2x128xf32>
    %39 = arith.mulf %0, %38 : vector<2x4x2x128xf32>
    %c1_26 = arith.constant 1 : index
    %c0_27 = arith.constant 0 : index
    %40 = memref.load %arg3[%c1_26, %c0_27] : memref<2x3xf32, #tpu.memory_space<smem>>
    %41 = vector.broadcast %40 : f32 to vector<2x4x2x128xf32>
    %42 = arith.addf %39, %41 : vector<2x4x2x128xf32>
    %43 = math.tanh %42 : vector<2x4x2x128xf32>
    %c1_28 = arith.constant 1 : index
    %c0_29 = arith.constant 0 : index
    %44 = memref.load %arg1[%c1_28, %c0_29] : memref<2x3xf32, #tpu.memory_space<smem>>
    %45 = vector.broadcast %44 : f32 to vector<2x4x2x128xf32>
    %46 = arith.mulf %45, %43 : vector<2x4x2x128xf32>
    %c1_30 = arith.constant 1 : index
    %c1_31 = arith.constant 1 : index
    %47 = memref.load %arg2[%c1_30, %c1_31] : memref<2x3xf32, #tpu.memory_space<smem>>
    %48 = vector.broadcast %47 : f32 to vector<2x4x2x128xf32>
    %49 = arith.mulf %0, %48 : vector<2x4x2x128xf32>
    %c1_32 = arith.constant 1 : index
    %c1_33 = arith.constant 1 : index
    %50 = memref.load %arg3[%c1_32, %c1_33] : memref<2x3xf32, #tpu.memory_space<smem>>
    %51 = vector.broadcast %50 : f32 to vector<2x4x2x128xf32>
    %52 = arith.addf %49, %51 : vector<2x4x2x128xf32>
    %53 = math.tanh %52 : vector<2x4x2x128xf32>
    %c1_34 = arith.constant 1 : index
    %c1_35 = arith.constant 1 : index
    %54 = memref.load %arg1[%c1_34, %c1_35] : memref<2x3xf32, #tpu.memory_space<smem>>
    %55 = vector.broadcast %54 : f32 to vector<2x4x2x128xf32>
    %56 = arith.mulf %55, %53 : vector<2x4x2x128xf32>
    %57 = arith.addf %46, %56 : vector<2x4x2x128xf32>
    %c1_36 = arith.constant 1 : index
    %c2_37 = arith.constant 2 : index
    %58 = memref.load %arg2[%c1_36, %c2_37] : memref<2x3xf32, #tpu.memory_space<smem>>
    %59 = vector.broadcast %58 : f32 to vector<2x4x2x128xf32>
    %60 = arith.mulf %0, %59 : vector<2x4x2x128xf32>
    %c1_38 = arith.constant 1 : index
    %c2_39 = arith.constant 2 : index
    %61 = memref.load %arg3[%c1_38, %c2_39] : memref<2x3xf32, #tpu.memory_space<smem>>
    %62 = vector.broadcast %61 : f32 to vector<2x4x2x128xf32>
    %63 = arith.addf %60, %62 : vector<2x4x2x128xf32>
    %64 = math.tanh %63 : vector<2x4x2x128xf32>
    %c1_40 = arith.constant 1 : index
    %c2_41 = arith.constant 2 : index
    %65 = memref.load %arg1[%c1_40, %c2_41] : memref<2x3xf32, #tpu.memory_space<smem>>
    %66 = vector.broadcast %65 : f32 to vector<2x4x2x128xf32>
    %67 = arith.mulf %66, %64 : vector<2x4x2x128xf32>
    %68 = arith.addf %57, %67 : vector<2x4x2x128xf32>
    %c1_42 = arith.constant 1 : index
    %69 = memref.load %arg4[%c1_42] : memref<2xf32, #tpu.memory_space<smem>>
    %70 = vector.broadcast %69 : f32 to vector<2x4x2x128xf32>
    %71 = arith.addf %68, %70 : vector<2x4x2x128xf32>
    %c0_43 = arith.constant 0 : index
    %c4 = arith.constant 4 : index
    %c0_44 = arith.constant 0 : index
    %c0_45 = arith.constant 0 : index
    %72 = vector.load %arg6[%c0_43, %c4, %c0_44, %c0_45] : memref<2x8x2x128xf32, #tpu.memory_space<vmem>>, vector<2x4x2x128xf32>
    tpu.vector_store %arg6[%c0_43, %c4, %c0_44, %c0_45], %71 {strides = array<i32>} : memref<2x8x2x128xf32, #tpu.memory_space<vmem>>, vector<2x4x2x128xf32>,
    return
  }
  func.func @transform_0(%arg0: i32) -> (i32, i32) {
    %c0_i32 = arith.constant 0 : i32
    %c0_i32_0 = arith.constant 0 : i32
    %c0_i32_1 = arith.constant 0 : i32
    return %c0_i32, %c0_i32_0 : i32, i32
  }
  func.func @transform_1(%arg0: i32) -> (i32, i32) {
    %c0_i32 = arith.constant 0 : i32
    %c0_i32_0 = arith.constant 0 : i32
    %c0_i32_1 = arith.constant 0 : i32
    return %c0_i32, %c0_i32_0 : i32, i32
  }
  func.func @transform_2(%arg0: i32) -> (i32, i32) {
    %c0_i32 = arith.constant 0 : i32
    %c0_i32_0 = arith.constant 0 : i32
    %c0_i32_1 = arith.constant 0 : i32
    return %c0_i32, %c0_i32_0 : i32, i32
  }
  func.func @transform_3(%arg0: i32) -> i32 {
    %c0_i32 = arith.constant 0 : i32
    %c0_i32_0 = arith.constant 0 : i32
    return %c0_i32 : i32
  }
  func.func @transform_4(%arg0: i32) -> (i32, i32, i32, i32) {
    %c0_i32 = arith.constant 0 : i32
    %c0_i32_0 = arith.constant 0 : i32
    %c0_i32_1 = arith.constant 0 : i32
    %c0_i32_2 = arith.constant 0 : i32
    return %c0_i32, %c0_i32_0, %arg0, %c0_i32_1 : i32, i32, i32, i32
  }
  func.func @transform_5(%arg0: i32) -> (i32, i32, i32, i32) {
    %c0_i32 = arith.constant 0 : i32
    %c0_i32_0 = arith.constant 0 : i32
    %c0_i32_1 = arith.constant 0 : i32
    %c0_i32_2 = arith.constant 0 : i32
    return %c0_i32, %c0_i32_0, %arg0, %c0_i32_1 : i32, i32, i32, i32
  }
}

</mosaic_0001>

<llo_original>
// kernel: tpu_custom_call.1
$region0: #{tpu_custom_call.1}
  #allocation0 [shape = 'u32[]', space=smem, size = 0x4, offset = 0x4, fixed_abs, tag = 'smem constant byte address 0x4 - core index']
  #allocation1 [shape = 'u32[72,128]{1,0:T(1,128)}', space=vmem, size = 0x9000, scoped, tag = 'internal scratch']
  %s0 = inlined_call_operand.hbm [shape: f32[2,3], index: 0, kind: input, shape index: {}]
  %s1 = inlined_call_operand.hbm [shape: f32[2,3], index: 1, kind: input, shape index: {}]
  %s2 = inlined_call_operand.hbm [shape: f32[2,3], index: 2, kind: input, shape index: {}]
  %s3 = inlined_call_operand.vmem [shape: f32[2], index: 3, kind: input, shape index: {}]
  %s4 = inlined_call_operand.hbm [shape: f32[2,4,2,128], index: 4, kind: input, shape index: {}]
  %s5 = inlined_call_operand.hbm [shape: f32[2,8,2,128], index: 5, kind: output, shape index: {}]
  %s6 = sld [smem:[#allocation0]]
  $region50: #{tpu_custom_call.1} parent=0
    _
  %s8 = ssub.s32 1, %s6
  %s9 = scalar_select 0, %s8, %s6
  $region1: #{tpu_custom_call.1} parent=0
    #allocation2 [shape = 'u8[1024]{0}', space=smem, size = 0x400, scoped, tag = 'input window, operand 0, single buffered']
    #allocation3 [shape = 's32[1]{0}', space=sflag, size = 0x4, scoped, tag = 'scoped memory for tpu_custom_call.1']
    #allocation4 [shape = 's32[1]{0}', space=sflag, size = 0x4, scoped, tag = 'scoped memory for tpu_custom_call.1']
    #allocation5 [shape = 's32[1]{0}', space=sflag, size = 0x4, scoped, tag = 'scoped memory for tpu_custom_call.1']
    #allocation6 [shape = 's32[1]{0}', space=sflag, size = 0x4, scoped, tag = 'scoped memory for tpu_custom_call.1']
    #allocation7 [shape = 'u8[1024]{0}', space=smem, size = 0x400, scoped, tag = 'input window, operand 1, single buffered']
    #allocation8 [shape = 's32[1]{0}', space=sflag, size = 0x4, scoped, tag = 'scoped memory for tpu_custom_call.1']
    #allocation9 [shape = 'u8[1024]{0}', space=smem, size = 0x400, scoped, tag = 'input window, operand 2, single buffered']
    #allocation10 [shape = 'u8[512]{0}', space=smem, size = 0x200, scoped, tag = 'input window, operand 3, single buffered']
    #allocation11 [shape = 'u8[8192]{0}', space=vmem, size = 0x2000, scoped, tag = 'input window, operand 4, single buffered']
    #allocation12 [shape = 'u8[16384]{0}', space=vmem, size = 0x4000, scoped, tag = 'output window, operand 0, single buffered']
    %10 = vsyncpa [#allocation5], 0
    %11 = vsyncpa [#allocation8], 0
    %12 = vsyncpa [#allocation6], 0
    %13 = vsyncpa [#allocation3], 0
    %14 = vsyncpa [#allocation4], 0
    // Predicated region
    $region2: #{tpu_custom_call.1} parent=1 // pred_check
      _
    $region3: #{tpu_custom_call.1} parent=1 // pred_check_branch
      %16 = sbr.rel (0) target = $region5
    $region4: #{tpu_custom_call.1} parent=1 // pred_region
      %18 = vsyncadd [#allocation5], 0
      %s20 = sshll.u32 %s0, 4
      %s21 = int_to_ptr.hbm [resolvable:$true] %s20
      %23 = dma.hbm_to_smem %s21, 32, [#allocation2], [#allocation5]
    $region5: #{tpu_custom_call.1} parent=1 // pred_fallthru
      _
    // Predicated region
    $region6: #{tpu_custom_call.1} parent=1 // pred_check
      _
    $region7: #{tpu_custom_call.1} parent=1 // pred_check_branch
      %25 = sbr.rel (0) target = $region9
    $region8: #{tpu_custom_call.1} parent=1 // pred_region
      %27 = vsyncadd [#allocation8], 0
      %s29 = sshll.u32 %s1, 4
      %s30 = int_to_ptr.hbm [resolvable:$true] %s29
      %32 = dma.hbm_to_smem %s30, 32, [#allocation7], [#allocation8]
    $region9: #{tpu_custom_call.1} parent=1 // pred_fallthru
      _
    // Predicated region
    $region10: #{tpu_custom_call.1} parent=1 // pred_check
      _
    $region11: #{tpu_custom_call.1} parent=1 // pred_check_branch
      %34 = sbr.rel (0) target = $region13
    $region12: #{tpu_custom_call.1} parent=1 // pred_region
      %36 = vsyncadd [#allocation8], 0
      %s38 = sshll.u32 %s2, 4
      %s39 = int_to_ptr.hbm [resolvable:$true] %s38
      %41 = dma.hbm_to_smem %s39, 32, [#allocation9], [#allocation8]
    $region13: #{tpu_custom_call.1} parent=1 // pred_fallthru
      _
    // Predicated region
    $region14: #{tpu_custom_call.1} parent=1 // pred_check
      _
    $region15: #{tpu_custom_call.1} parent=1 // pred_check_branch
      %43 = sbr.rel (0) target = $region17
    $region16: #{tpu_custom_call.1} parent=1 // pred_region
      %45 = vsyncadd [#allocation6], 0
      %s47 = sshll.u32 %s3, 4
      %s48 = int_to_ptr.vmem [resolvable:$true] %s47
      %50 = dma.vmem_to_smem %s48, 16, [#allocation10], [#allocation6]
    $region17: #{tpu_custom_call.1} parent=1 // pred_fallthru
      _
    // Predicated region
    $region18: #{tpu_custom_call.1} parent=1 // pred_check
      _
    $region19: #{tpu_custom_call.1} parent=1 // pred_check_branch
      %52 = sbr.rel (0) target = $region21
    $region20: #{tpu_custom_call.1} parent=1 // pred_region
      %54 = vsyncadd [#allocation3], 0
      %s55 = sshll.u32 %s4, 4
      %s56 = int_to_ptr.hbm [resolvable:$true] %s55
      %s57 = sshll.u32 [#allocation11], 4
      %s58 = int_to_ptr.vmem [resolvable:$true] %s57
      %63 = dma.hbm_to_vmem [thread:$0]  %s56, 256, %s58, [#allocation3], 32, 32, 2
    $region21: #{tpu_custom_call.1} parent=1 // pred_fallthru
      _
    // Predicated region
    $region22: #{tpu_custom_call.1} parent=1 // pred_check
      _
    $region23: #{tpu_custom_call.1} parent=1 // pred_check_branch
      %65 = sbr.rel (0) target = $region25
    $region24: #{tpu_custom_call.1} parent=1 // pred_region
      %67 = dma.done [#allocation5], 32
    $region25: #{tpu_custom_call.1} parent=1 // pred_fallthru
      _
    // Predicated region
    $region26: #{tpu_custom_call.1} parent=1 // pred_check
      _
    $region27: #{tpu_custom_call.1} parent=1 // pred_check_branch
      %69 = sbr.rel (0) target = $region29
    $region28: #{tpu_custom_call.1} parent=1 // pred_region
      %71 = dma.done [#allocation8], 32
    $region29: #{tpu_custom_call.1} parent=1 // pred_fallthru
      _
    // Predicated region
    $region30: #{tpu_custom_call.1} parent=1 // pred_check
      _
    $region31: #{tpu_custom_call.1} parent=1 // pred_check_branch
      %73 = sbr.rel (0) target = $region33
    $region32: #{tpu_custom_call.1} parent=1 // pred_region
      %75 = dma.done [#allocation8], 32
    $region33: #{tpu_custom_call.1} parent=1 // pred_fallthru
      _
    // Predicated region
    $region34: #{tpu_custom_call.1} parent=1 // pred_check
      _
    $region35: #{tpu_custom_call.1} parent=1 // pred_check_branch
      %77 = sbr.rel (0) target = $region37
    $region36: #{tpu_custom_call.1} parent=1 // pred_region
      %79 = dma.done [#allocation6], 16
    $region37: #{tpu_custom_call.1} parent=1 // pred_fallthru
      _
    // Predicated region
    $region38: #{tpu_custom_call.1} parent=1 // pred_check
      _
    $region39: #{tpu_custom_call.1} parent=1 // pred_check_branch
      %81 = sbr.rel (0) target = $region41
    $region40: #{tpu_custom_call.1} parent=1 // pred_region
      %83 = dma.done [#allocation3], 256
    $region41: #{tpu_custom_call.1} parent=1 // pred_fallthru
      _
    %84 = sfence
    %v85 = vld [vmem:[#allocation11] sm:$0x3]
    %v86 = vld [vmem:[#allocation11 + $0x2] sm:$0x3]
    %v87 = vld [vmem:[#allocation11 + $0x4] sm:$0x3]
    %v88 = vld [vmem:[#allocation11 + $0x6] sm:$0x3]
    %v89 = vld [vmem:[#allocation11 + $0x8] sm:$0x3]
    %v90 = vld [vmem:[#allocation11 + $0xa] sm:$0x3]
    %v91 = vld [vmem:[#allocation11 + $0xc] sm:$0x3]
    %v92 = vld [vmem:[#allocation11 + $0xe] sm:$0x3]
    %s93 = sld [smem:[#allocation7]]
    %v94 = vstv %s93
    %v95 = vmul.f32 %v85, %v94
    %v96 = vmul.f32 %v86, %v94
    %v97 = vmul.f32 %v87, %v94
    %v98 = vmul.f32 %v88, %v94
    %v99 = vmul.f32 %v89, %v94
    %v100 = vmul.f32 %v90, %v94
    %v101 = vmul.f32 %v91, %v94
    %v102 = vmul.f32 %v92, %v94
    %s103 = sld [smem:[#allocation9]]
    %v104 = vstv %s103
    %v105 = vadd.f32 %v95, %v104
    %v106 = vadd.f32 %v96, %v104
    %v107 = vadd.f32 %v97, %v104
    %v108 = vadd.f32 %v98, %v104
    %v109 = vadd.f32 %v99, %v104
    %v110 = vadd.f32 %v100, %v104
    %v111 = vadd.f32 %v101, %v104
    %v112 = vadd.f32 %v102, %v104
    %v113 = vtanh.pop %v105
    %v114 = vtanh.pop %v106
    %v115 = vtanh.pop %v107
    %v116 = vtanh.pop %v108
    %v117 = vtanh.pop %v109
    %v118 = vtanh.pop %v110
    %v119 = vtanh.pop %v111
    %v120 = vtanh.pop %v112
    %s121 = sld [smem:[#allocation2]]
    %v122 = vstv %s121
    %v123 = vmul.f32 %v122, %v113
    %v124 = vmul.f32 %v122, %v114
    %v125 = vmul.f32 %v122, %v115
    %v126 = vmul.f32 %v122, %v116
    %v127 = vmul.f32 %v122, %v117
    %v128 = vmul.f32 %v122, %v118
    %v129 = vmul.f32 %v122, %v119
    %v130 = vmul.f32 %v122, %v120
    %s131 = sld [smem:[#allocation7 + $0x1]]
    %v132 = vstv %s131
    %v133 = vmul.f32 %v85, %v132
    %v134 = vmul.f32 %v86, %v132
    %v135 = vmul.f32 %v87, %v132
    %v136 = vmul.f32 %v88, %v132
    %v137 = vmul.f32 %v89, %v132
    %v138 = vmul.f32 %v90, %v132
    %v139 = vmul.f32 %v91, %v132
    %v140 = vmul.f32 %v92, %v132
    %s141 = sld [smem:[#allocation9 + $0x1]]
    %v142 = vstv %s141
    %v143 = vadd.f32 %v133, %v142
    %v144 = vadd.f32 %v134, %v142
    %v145 = vadd.f32 %v135, %v142
    %v146 = vadd.f32 %v136, %v142
    %v147 = vadd.f32 %v137, %v142
    %v148 = vadd.f32 %v138, %v142
    %v149 = vadd.f32 %v139, %v142
    %v150 = vadd.f32 %v140, %v142
    %v151 = vtanh.pop %v143
    %v152 = vtanh.pop %v144
    %v153 = vtanh.pop %v145
    %v154 = vtanh.pop %v146
    %v155 = vtanh.pop %v147
    %v156 = vtanh.pop %v148
    %v157 = vtanh.pop %v149
    %v158 = vtanh.pop %v150
    %s159 = sld [smem:[#allocation2 + $0x1]]
    %v160 = vstv %s159
    %v161 = vmul.f32 %v160, %v151
    %v162 = vmul.f32 %v160, %v152
    %v163 = vmul.f32 %v160, %v153
    %v164 = vmul.f32 %v160, %v154
    %v165 = vmul.f32 %v160, %v155
    %v166 = vmul.f32 %v160, %v156
    %v167 = vmul.f32 %v160, %v157
    %v168 = vmul.f32 %v160, %v158
    %v169 = vadd.f32 %v123, %v161
    %v170 = vadd.f32 %v124, %v162
    %v171 = vadd.f32 %v125, %v163
    %v172 = vadd.f32 %v126, %v164
    %v173 = vadd.f32 %v127, %v165
    %v174 = vadd.f32 %v128, %v166
    %v175 = vadd.f32 %v129, %v167
    %v176 = vadd.f32 %v130, %v168
    %s177 = sld [smem:[#allocation7 + $0x2]]
    %v178 = vstv %s177
    %v179 = vmul.f32 %v85, %v178
    %v180 = vmul.f32 %v86, %v178
    %v181 = vmul.f32 %v87, %v178
    %v182 = vmul.f32 %v88, %v178
    %v183 = vmul.f32 %v89, %v178
    %v184 = vmul.f32 %v90, %v178
    %v185 = vmul.f32 %v91, %v178
    %v186 = vmul.f32 %v92, %v178
    %s187 = sld [smem:[#allocation9 + $0x2]]
    %v188 = vstv %s187
    %v189 = vadd.f32 %v179, %v188
    %v190 = vadd.f32 %v180, %v188
    %v191 = vadd.f32 %v181, %v188
    %v192 = vadd.f32 %v182, %v188
    %v193 = vadd.f32 %v183, %v188
    %v194 = vadd.f32 %v184, %v188
    %v195 = vadd.f32 %v185, %v188
    %v196 = vadd.f32 %v186, %v188
    %v197 = vtanh.pop %v189
    %v198 = vtanh.pop %v190
    %v199 = vtanh.pop %v191
    %v200 = vtanh.pop %v192
    %v201 = vtanh.pop %v193
    %v202 = vtanh.pop %v194
    %v203 = vtanh.pop %v195
    %v204 = vtanh.pop %v196
    %s205 = sld [smem:[#allocation2 + $0x2]]
    %v206 = vstv %s205
    %v207 = vmul.f32 %v206, %v197
    %v208 = vmul.f32 %v206, %v198
    %v209 = vmul.f32 %v206, %v199
    %v210 = vmul.f32 %v206, %v200
    %v211 = vmul.f32 %v206, %v201
    %v212 = vmul.f32 %v206, %v202
    %v213 = vmul.f32 %v206, %v203
    %v214 = vmul.f32 %v206, %v204
    %v215 = vadd.f32 %v169, %v207
    %v216 = vadd.f32 %v170, %v208
    %v217 = vadd.f32 %v171, %v209
    %v218 = vadd.f32 %v172, %v210
    %v219 = vadd.f32 %v173, %v211
    %v220 = vadd.f32 %v174, %v212
    %v221 = vadd.f32 %v175, %v213
    %v222 = vadd.f32 %v176, %v214
    %s223 = sld [smem:[#allocation10]]
    %v224 = vstv %s223
    %v225 = vadd.f32 %v215, %v224
    %v226 = vadd.f32 %v216, %v224
    %v227 = vadd.f32 %v217, %v224
    %v228 = vadd.f32 %v218, %v224
    %v229 = vadd.f32 %v219, %v224
    %v230 = vadd.f32 %v220, %v224
    %v231 = vadd.f32 %v221, %v224
    %v232 = vadd.f32 %v222, %v224
    %233 = vst [vmem:[#allocation12] sm:$0x3] %v225
    %234 = vst [vmem:[#allocation12 + $0x2] sm:$0x3] %v226
    %235 = vst [vmem:[#allocation12 + $0x4] sm:$0x3] %v227
    %236 = vst [vmem:[#allocation12 + $0x6] sm:$0x3] %v228
    %237 = vst [vmem:[#allocation12 + $0x10] sm:$0x3] %v229
    %238 = vst [vmem:[#allocation12 + $0x12] sm:$0x3] %v230
    %239 = vst [vmem:[#allocation12 + $0x14] sm:$0x3] %v231
    %240 = vst [vmem:[#allocation12 + $0x16] sm:$0x3] %v232
    %s241 = sld [smem:[#allocation7 + $0x80]]
    %v242 = vstv %s241
    %v243 = vmul.f32 %v85, %v242
    %v244 = vmul.f32 %v86, %v242
    %v245 = vmul.f32 %v87, %v242
    %v246 = vmul.f32 %v88, %v242
    %v247 = vmul.f32 %v89, %v242
    %v248 = vmul.f32 %v90, %v242
    %v249 = vmul.f32 %v91, %v242
    %v250 = vmul.f32 %v92, %v242
    %s251 = sld [smem:[#allocation9 + $0x80]]
    %v252 = vstv %s251
    %v253 = vadd.f32 %v243, %v252
    %v254 = vadd.f32 %v244, %v252
    %v255 = vadd.f32 %v245, %v252
    %v256 = vadd.f32 %v246, %v252
    %v257 = vadd.f32 %v247, %v252
    %v258 = vadd.f32 %v248, %v252
    %v259 = vadd.f32 %v249, %v252
    %v260 = vadd.f32 %v250, %v252
    %v261 = vtanh.pop %v253
    %v262 = vtanh.pop %v254
    %v263 = vtanh.pop %v255
    %v264 = vtanh.pop %v256
    %v265 = vtanh.pop %v257
    %v266 = vtanh.pop %v258
    %v267 = vtanh.pop %v259
    %v268 = vtanh.pop %v260
    %s269 = sld [smem:[#allocation2 + $0x80]]
    %v270 = vstv %s269
    %v271 = vmul.f32 %v270, %v261
    %v272 = vmul.f32 %v270, %v262
    %v273 = vmul.f32 %v270, %v263
    %v274 = vmul.f32 %v270, %v264
    %v275 = vmul.f32 %v270, %v265
    %v276 = vmul.f32 %v270, %v266
    %v277 = vmul.f32 %v270, %v267
    %v278 = vmul.f32 %v270, %v268
    %s279 = sld [smem:[#allocation7 + $0x81]]
    %v280 = vstv %s279
    %v281 = vmul.f32 %v85, %v280
    %v282 = vmul.f32 %v86, %v280
    %v283 = vmul.f32 %v87, %v280
    %v284 = vmul.f32 %v88, %v280
    %v285 = vmul.f32 %v89, %v280
    %v286 = vmul.f32 %v90, %v280
    %v287 = vmul.f32 %v91, %v280
    %v288 = vmul.f32 %v92, %v280
    %s289 = sld [smem:[#allocation9 + $0x81]]
    %v290 = vstv %s289
    %v291 = vadd.f32 %v281, %v290
    %v292 = vadd.f32 %v282, %v290
    %v293 = vadd.f32 %v283, %v290
    %v294 = vadd.f32 %v284, %v290
    %v295 = vadd.f32 %v285, %v290
    %v296 = vadd.f32 %v286, %v290
    %v297 = vadd.f32 %v287, %v290
    %v298 = vadd.f32 %v288, %v290
    %v299 = vtanh.pop %v291
    %v300 = vtanh.pop %v292
    %v301 = vtanh.pop %v293
    %v302 = vtanh.pop %v294
    %v303 = vtanh.pop %v295
    %v304 = vtanh.pop %v296
    %v305 = vtanh.pop %v297
    %v306 = vtanh.pop %v298
    %s307 = sld [smem:[#allocation2 + $0x81]]
    %v308 = vstv %s307
    %v309 = vmul.f32 %v308, %v299
    %v310 = vmul.f32 %v308, %v300
    %v311 = vmul.f32 %v308, %v301
    %v312 = vmul.f32 %v308, %v302
    %v313 = vmul.f32 %v308, %v303
    %v314 = vmul.f32 %v308, %v304
    %v315 = vmul.f32 %v308, %v305
    %v316 = vmul.f32 %v308, %v306
    %v317 = vadd.f32 %v271, %v309
    %v318 = vadd.f32 %v272, %v310
    %v319 = vadd.f32 %v273, %v311
    %v320 = vadd.f32 %v274, %v312
    %v321 = vadd.f32 %v275, %v313
    %v322 = vadd.f32 %v276, %v314
    %v323 = vadd.f32 %v277, %v315
    %v324 = vadd.f32 %v278, %v316
    %s325 = sld [smem:[#allocation7 + $0x82]]
    %v326 = vstv %s325
    %v327 = vmul.f32 %v85, %v326
    %v328 = vmul.f32 %v86, %v326
    %v329 = vmul.f32 %v87, %v326
    %v330 = vmul.f32 %v88, %v326
    %v331 = vmul.f32 %v89, %v326
    %v332 = vmul.f32 %v90, %v326
    %v333 = vmul.f32 %v91, %v326
    %v334 = vmul.f32 %v92, %v326
    %s335 = sld [smem:[#allocation9 + $0x82]]
    %v336 = vstv %s335
    %v337 = vadd.f32 %v327, %v336
    %v338 = vadd.f32 %v328, %v336
    %v339 = vadd.f32 %v329, %v336
    %v340 = vadd.f32 %v330, %v336
    %v341 = vadd.f32 %v331, %v336
    %v342 = vadd.f32 %v332, %v336
    %v343 = vadd.f32 %v333, %v336
    %v344 = vadd.f32 %v334, %v336
    %v345 = vtanh.pop %v337
    %v346 = vtanh.pop %v338
    %v347 = vtanh.pop %v339
    %v348 = vtanh.pop %v340
    %v349 = vtanh.pop %v341
    %v350 = vtanh.pop %v342
    %v351 = vtanh.pop %v343
    %v352 = vtanh.pop %v344
    %s353 = sld [smem:[#allocation2 + $0x82]]
    %v354 = vstv %s353
    %v355 = vmul.f32 %v354, %v345
    %v356 = vmul.f32 %v354, %v346
    %v357 = vmul.f32 %v354, %v347
    %v358 = vmul.f32 %v354, %v348
    %v359 = vmul.f32 %v354, %v349
    %v360 = vmul.f32 %v354, %v350
    %v361 = vmul.f32 %v354, %v351
    %v362 = vmul.f32 %v354, %v352
    %v363 = vadd.f32 %v317, %v355
    %v364 = vadd.f32 %v318, %v356
    %v365 = vadd.f32 %v319, %v357
    %v366 = vadd.f32 %v320, %v358
    %v367 = vadd.f32 %v321, %v359
    %v368 = vadd.f32 %v322, %v360
    %v369 = vadd.f32 %v323, %v361
    %v370 = vadd.f32 %v324, %v362
    %s371 = sld [smem:[#allocation10 + $0x1]]
    %v372 = vstv %s371
    %v373 = vadd.f32 %v363, %v372
    %v374 = vadd.f32 %v364, %v372
    %v375 = vadd.f32 %v365, %v372
    %v376 = vadd.f32 %v366, %v372
    %v377 = vadd.f32 %v367, %v372
    %v378 = vadd.f32 %v368, %v372
    %v379 = vadd.f32 %v369, %v372
    %v380 = vadd.f32 %v370, %v372
    %s381 = scalar_lea.vmem [#allocation12], 8
    %382 = vst [vmem:[%s381] sm:$0x3] %v373
    %383 = vst [vmem:[%s381 + $0x2] sm:$0x3] %v374
    %384 = vst [vmem:[%s381 + $0x4] sm:$0x3] %v375
    %385 = vst [vmem:[%s381 + $0x6] sm:$0x3] %v376
    %386 = vst [vmem:[%s381 + $0x10] sm:$0x3] %v377
    %387 = vst [vmem:[%s381 + $0x12] sm:$0x3] %v378
    %388 = vst [vmem:[%s381 + $0x14] sm:$0x3] %v379
    %389 = vst [vmem:[%s381 + $0x16] sm:$0x3] %v380
    // Predicated region
    $region42: #{tpu_custom_call.1} parent=1 // pred_check
      _
    $region43: #{tpu_custom_call.1} parent=1 // pred_check_branch
      %391 = sbr.rel (0) target = $region45
    $region44: #{tpu_custom_call.1} parent=1 // pred_region
      %393 = vsyncadd [#allocation4], 0
      %s394 = sshll.u32 [#allocation12], 4
      %s395 = int_to_ptr.vmem [resolvable:$true] %s394
      %s396 = sshll.u32 %s5, 4
      %s397 = int_to_ptr.hbm [resolvable:$true] %s396
      %402 = dma.vmem_to_hbm [thread:$0]  %s395, 512, %s397, [#allocation4], 32, 32, 2
    $region45: #{tpu_custom_call.1} parent=1 // pred_fallthru
      _
    // Predicated region
    $region46: #{tpu_custom_call.1} parent=1 // pred_check
      _
    $region47: #{tpu_custom_call.1} parent=1 // pred_check_branch
      %404 = sbr.rel (0) target = $region49
    $region48: #{tpu_custom_call.1} parent=1 // pred_region
      %406 = dma.done [#allocation4], 512
    $region49: #{tpu_custom_call.1} parent=1 // pred_fallthru
      _
    %407 = vsyncpa [#allocation3], 1
    %408 = vsyncpa [#allocation4], 1
    %409 = vsyncpa [#allocation5], 1
    %410 = vsyncpa [#allocation8], 1
    %411 = vsyncpa [#allocation6], 1

</llo_original>
